<compile_context>
chip_gen: v7x
topology: tpu7x:2x2x1
jax: 0.10.0
libtpu: 0.0.40
codegen_flags: <defaults>
</compile_context>

<pallas_src>
import functools

import numpy as np
import jax
import jax.numpy as jnp
from jax import lax
from jax.experimental import pallas as pl
from jax.experimental.pallas import tpu as pltpu  # noqa: F401


# ----------------------------- fused Pallas kernel -----------------------------

def _dino_fused_kernel(patches_ref, w_ref, mblk_ref, s_ref, o_ref, *, p, threshold):
    # 1) patch embedding for obs + all references in ONE MXU matmul.
    #    Bias is folded into w (ones column appended to patches in the wrapper).
    #    rows [0, p)             -> obs tokens
    #    rows [p*(n+1), p*(n+2)) -> reference n tokens
    tok = jnp.dot(patches_ref[...], w_ref[...],
                  preferred_element_type=jnp.float32)                     # (ntot, Cp)

    # obs tokens, normalized exactly like torch: x / ||x|| + 1e-6 (eps AFTER divide)
    obs_tok = tok[:p, :]                                                  # (p, Cp)
    obs_n = obs_tok * lax.rsqrt(
        jnp.sum(obs_tok * obs_tok, axis=-1, keepdims=True)) + 1e-6        # (p, Cp)

    # 2/3) ALL references pooled with one MXU matmul (mask weights pre-normalized
    #      in the wrapper -> masked mean directly), one rsqrt for every row,
    #      one matmul for the cosine similarities, one XLU max over references.
    pooled = jnp.dot(mblk_ref[...], tok,
                     preferred_element_type=jnp.float32)                  # (nref, Cp)
    ref_n = pooled * lax.rsqrt(
        jnp.sum(pooled * pooled, axis=-1, keepdims=True)) + 1e-6          # (nref, Cp)
    sim = lax.dot_general(ref_n, obs_n, (((1,), (1,)), ((), ())),
                          preferred_element_type=jnp.float32)             # (nref, p)
    sim_max = jnp.max(sim, axis=0, keepdims=True)                         # (1, p)

    # 4) threshold + static scatter matrix -> lane-dense (1, H*W) output store
    matches = (sim_max > threshold).astype(jnp.float32)                   # (1, p)
    counts = jnp.dot(matches, s_ref[...],
                     preferred_element_type=jnp.float32)                  # (1, H*W)
    o_ref[...] = (counts > 0.0).astype(jnp.float32)


# ----------------------------- plain-JAX glue -----------------------------

IMAGENET_MEAN = jnp.array([0.485, 0.456, 0.406], jnp.float32)
IMAGENET_STD = jnp.array([0.229, 0.224, 0.225], jnp.float32)


def _round_up(x, m):
    return ((x + m - 1) // m) * m


def preprocess(imgs_nchw, resize_dim):
    # Resize((R,R)) -> /255 -> Normalize   (timm transform tail, synthetic stats)
    b, c, h, w = imgs_nchw.shape
    x = jax.image.resize(imgs_nchw.astype(jnp.float32),
                         (b, c, resize_dim, resize_dim),
                         method="bilinear", antialias=False)
    x = x / 255.0
    return (x - IMAGENET_MEAN.reshape(1, 3, 1, 1)) / IMAGENET_STD.reshape(1, 3, 1, 1)


def patchify(imgs_nchw, patch):
    b, c, h, w = imgs_nchw.shape
    hp, wp = h // patch, w // patch
    x = imgs_nchw.reshape(b, c, hp, patch, wp, patch)
    x = x.transpose(0, 2, 4, 1, 3, 5)                 # (B, hp, wp, C, p, p)
    return x.reshape(b * hp * wp, c * patch * patch), hp, wp


def dino_matcher_forward(obs, references, w_patch, b_patch,
                         resize_dim=16, patch=4, match_threshold=0.5):
    obs_c, obs_h, obs_w = obs.shape
    patch_dim = obs_c * patch * patch
    embed_dim = w_patch.shape[1]
    nref = references.shape[0]

    # extract_features(obs) / batched_extract_features(references[..., 0:3])
    # TODO(synk): full timm ViT backbone (forward_features) replaced by a synthetic
    # patch-embedding projection; transformer blocks have no in-script equivalent.
    obs_pre = preprocess(obs[None], resize_dim)
    obs_patches, hp, wp = patchify(obs_pre, patch)                        # (p, D)
    p = hp * wp

    ref_imgs = jnp.transpose(references[..., 0:3], (0, 3, 1, 2))          # NHWC -> NCHW
    ref_pre = preprocess(ref_imgs, resize_dim)
    ref_patches, _, _ = patchify(ref_pre, patch)                          # (nref*p, D)

    # one combined matrix so the fused kernel does a single embedding matmul
    all_patches = jnp.concatenate([obs_patches, ref_patches], axis=0)     # (ntot, D)
    n_total = (1 + nref) * p

    # fold bias into the matmul (ones column + b_patch as an extra weight row),
    # then zero-pad D+1 and C up to 128 so every last dim is a full vreg.
    ones_col = jnp.ones((n_total, 1), jnp.float32)
    patches_aug = jnp.concatenate([all_patches, ones_col], axis=1)        # (ntot, D+1)
    w_aug = jnp.concatenate([w_patch, b_patch], axis=0)                   # (D+1, C)
    d_aug = patch_dim + 1
    d_pad = _round_up(d_aug, 128)
    c_pad = _round_up(embed_dim, 128)
    patches_pad = jnp.pad(patches_aug, ((0, 0), (0, d_pad - d_aug)))      # (ntot, d_pad)
    w_pad = jnp.pad(w_aug, ((0, d_pad - d_aug), (0, c_pad - embed_dim)))  # (d_pad, c_pad)

    # segmentation masks resized onto the token grid (align_corners=False),
    # turned into a block-diagonal pooling matrix over ALL tokens, pre-divided by
    # the (mask_sum + 1e-6) denominator so the kernel's matmul is the masked mean.
    masks = references[..., 3].astype(jnp.float32)                        # (nref, Hr, Wr)
    masks_r = jax.image.resize(masks[:, None], (nref, 1, hp, wp),
                               method="bilinear", antialias=False)
    masks_flat = masks_r.reshape(nref, p)
    weights = masks_flat / (jnp.sum(masks_flat, axis=1, keepdims=True) + 1e-6)
    m_blk = jnp.zeros((nref, n_total), jnp.float32)
    for n in range(nref):                                                 # nref static & tiny
        m_blk = m_blk.at[n, (n + 1) * p:(n + 2) * p].set(weights[n])

    # static scatter matrix S (p, H*W): token k projects to pixel ymap*W + xmap
    # (torch.round == banker's rounding == np.round). Output becomes lane-dense.
    hs = obs_h / hp
    ws = obs_w / wp
    ymap = np.clip(np.round((np.arange(hp) + 0.5) * hs), 0, obs_h - 1).astype(np.int64)
    xmap = np.clip(np.round((np.arange(wp) + 0.5) * ws), 0, obs_w - 1).astype(np.int64)
    pix = (ymap[:, None] * obs_w + xmap[None, :]).reshape(-1)             # (p,)
    S = np.zeros((p, obs_h * obs_w), np.float32)
    S[np.arange(p), pix] = 1.0
    scatter = jnp.asarray(S)

    kernel = functools.partial(_dino_fused_kernel, p=p, threshold=match_threshold)
    out_flat = pl.pallas_call(
        kernel,
        out_shape=jax.ShapeDtypeStruct((1, obs_h * obs_w), jnp.float32),
        grid=(1,),
        in_specs=[pl.BlockSpec((n_total, d_pad), lambda i: (0, 0)),
                  pl.BlockSpec((d_pad, c_pad), lambda i: (0, 0)),
                  pl.BlockSpec((nref, n_total), lambda i: (0, 0)),
                  pl.BlockSpec((p, obs_h * obs_w), lambda i: (0, 0))],
        out_specs=pl.BlockSpec((1, obs_h * obs_w), lambda i: (0, 0)),
    )(patches_pad, w_pad, m_blk, scatter)
    return out_flat.reshape(obs_h, obs_w)


# --------------------------------- main ---------------------------------

if __name__ == "__main__":
    key = jax.random.PRNGKey(0)
    k1, k2, k3, k4 = jax.random.split(key, 4)

    # obs image (C, H, W) with raw pixel values
    obs = jax.random.uniform(k1, (3, 32, 32), jnp.float32, 0.0, 255.0)

    # references: (Nref, H, W, 4) = RGB + segmentation mask channel
    ref_rgb = jax.random.uniform(k2, (2, 24, 24, 3), jnp.float32, 0.0, 255.0)
    mask = jnp.zeros((2, 24, 24), jnp.float32).at[:, 6:18, 6:18].set(1.0)
    references = jnp.concatenate([ref_rgb, mask[..., None]], axis=-1)

    # deterministic synthetic "backbone" parameters (patch-embedding projection)
    patch, resize_dim, embed_dim = 4, 16, 32
    patch_dim = 3 * patch * patch
    w_patch = 0.02 * jax.random.normal(k3, (patch_dim, embed_dim), jnp.float32)
    b_patch = 0.02 * jax.random.normal(k4, (1, embed_dim), jnp.float32)

    forward = jax.jit(functools.partial(dino_matcher_forward,
                                        resize_dim=resize_dim, patch=patch,
                                        match_threshold=0.5))
    out = forward(obs, references, w_patch, b_patch)
    out = jax.block_until_ready(out)
    assert out.shape == (32, 32)
    assert bool(jnp.all(jnp.isfinite(out)))
    print("KERNEL_OK")
</pallas_src>

<mosaic_0001>
module attributes {stable_mosaic.version = 11 : i64} {
  func.func @_dino_fused_kernel(%arg0: i32, %arg1: memref<48x128xf32, #tpu.memory_space<vmem>>, %arg2: memref<128x128xf32, #tpu.memory_space<vmem>>, %arg3: memref<2x48xf32, #tpu.memory_space<vmem>>, %arg4: memref<16x1024xf32, #tpu.memory_space<vmem>>, %arg5: memref<1x1024xf32, #tpu.memory_space<vmem>>) attributes {dimension_semantics = [#tpu.dimension_semantics<arbitrary>], iteration_bounds = array<i64: 1>, scalar_prefetch = 0 : i64, scratch_operands = 0 : i64, tpu.core_type = #tpu.core_type<tc>, window_params = [{pipeline_mode = #tpu.pipeline_mode<synchronous>, transform_indices = @transform_0, window_bounds = array<i64: 48, 128>}, {pipeline_mode = #tpu.pipeline_mode<synchronous>, transform_indices = @transform_1, window_bounds = array<i64: 128, 128>}, {pipeline_mode = #tpu.pipeline_mode<synchronous>, transform_indices = @transform_2, window_bounds = array<i64: 2, 48>}, {pipeline_mode = #tpu.pipeline_mode<synchronous>, transform_indices = @transform_3, window_bounds = array<i64: 16, 1024>}, {pipeline_mode = #tpu.pipeline_mode<synchronous>, transform_indices = @transform_4, window_bounds = array<i64: 1, 1024>}]} {
    %c0 = arith.constant 0 : index
    %c0_0 = arith.constant 0 : index
    %0 = vector.load %arg1[%c0, %c0_0] : memref<48x128xf32, #tpu.memory_space<vmem>>, vector<48x128xf32>
    %c0_1 = arith.constant 0 : index
    %c0_2 = arith.constant 0 : index
    %1 = vector.load %arg2[%c0_1, %c0_2] : memref<128x128xf32, #tpu.memory_space<vmem>>, vector<128x128xf32>
    %cst = arith.constant dense<0.000000e+00> : vector<48x128xf32>
    %2 = tpu.matmul %0, %1, %cst {dimension_numbers = #tpu.dot_dimension_numbers<[1], [0], [0], [1], [0, 0, 1, 1], [], []>} : vector<48x128xf32>, vector<128x128xf32>, vector<48x128xf32> -> vector<48x128xf32>
    %3 = vector.extract_strided_slice %2 {offsets = [0, 0], sizes = [16, 128], strides = [1, 1]} : vector<48x128xf32> to vector<16x128xf32>
    %4 = arith.mulf %3, %3 : vector<16x128xf32>
    %cst_3 = arith.constant dense<0.000000e+00> : vector<16xf32>
    %5 = vector.multi_reduction <add>, %4, %cst_3 [1] : vector<16x128xf32> to vector<16xf32>
    %6 = vector.shape_cast %5 : vector<16xf32> to vector<16x1xf32>
    %7 = math.rsqrt %6 : vector<16x1xf32>
    %8 = vector.broadcast %7 : vector<16x1xf32> to vector<16x128xf32>
    %9 = arith.mulf %3, %8 : vector<16x128xf32>
    %cst_4 = arith.constant 9.99999997E-7 : f32
    %10 = vector.broadcast %cst_4 : f32 to vector<16x128xf32>
    %11 = arith.addf %9, %10 : vector<16x128xf32>
    %c0_5 = arith.constant 0 : index
    %c0_6 = arith.constant 0 : index
    %12 = vector.load %arg3[%c0_5, %c0_6] : memref<2x48xf32, #tpu.memory_space<vmem>>, vector<2x48xf32>
    %cst_7 = arith.constant dense<0.000000e+00> : vector<2x128xf32>
    %13 = tpu.matmul %12, %2, %cst_7 {dimension_numbers = #tpu.dot_dimension_numbers<[1], [0], [0], [1], [0, 0, 1, 1], [], []>} : vector<2x48xf32>, vector<48x128xf32>, vector<2x128xf32> -> vector<2x128xf32>
    %14 = arith.mulf %13, %13 : vector<2x128xf32>
    %cst_8 = arith.constant dense<0.000000e+00> : vector<2xf32>
    %15 = vector.multi_reduction <add>, %14, %cst_8 [1] : vector<2x128xf32> to vector<2xf32>
    %16 = vector.shape_cast %15 : vector<2xf32> to vector<2x1xf32>
    %17 = math.rsqrt %16 : vector<2x1xf32>
    %18 = vector.broadcast %17 : vector<2x1xf32> to vector<2x128xf32>
    %19 = arith.mulf %13, %18 : vector<2x128xf32>
    %cst_9 = arith.constant 9.99999997E-7 : f32
    %20 = vector.broadcast %cst_9 : f32 to vector<2x128xf32>
    %21 = arith.addf %19, %20 : vector<2x128xf32>
    %cst_10 = arith.constant dense<0.000000e+00> : vector<2x16xf32>
    %22 = tpu.matmul %21, %11, %cst_10 {dimension_numbers = #tpu.dot_dimension_numbers<[1], [1], [0], [0], [0, 0, 1, 0], [], []>} : vector<2x128xf32>, vector<16x128xf32>, vector<2x16xf32> -> vector<2x16xf32>
    %cst_11 = arith.constant dense<0xFF800000> : vector<16xf32>
    %23 = vector.multi_reduction <maximumf>, %22, %cst_11 [0] : vector<2x16xf32> to vector<16xf32>
    %24 = vector.shape_cast %23 : vector<16xf32> to vector<1x16xf32>
    %cst_12 = arith.constant 5.000000e-01 : f32
    %25 = vector.broadcast %cst_12 : f32 to vector<1x16xf32>
    %26 = arith.cmpf ogt, %24, %25 : vector<1x16xf32>
    %27 = arith.extui %26 : vector<1x16xi1> to vector<1x16xi32>
    %28 = arith.sitofp %27 : vector<1x16xi32> to vector<1x16xf32>
    %c0_13 = arith.constant 0 : index
    %c0_14 = arith.constant 0 : index
    %29 = vector.load %arg4[%c0_13, %c0_14] : memref<16x1024xf32, #tpu.memory_space<vmem>>, vector<16x1024xf32>
    %cst_15 = arith.constant dense<0.000000e+00> : vector<1x1024xf32>
    %30 = tpu.matmul %28, %29, %cst_15 {dimension_numbers = #tpu.dot_dimension_numbers<[1], [0], [0], [1], [0, 0, 1, 1], [], []>} : vector<1x16xf32>, vector<16x1024xf32>, vector<1x1024xf32> -> vector<1x1024xf32>
    %cst_16 = arith.constant 0.000000e+00 : f32
    %31 = vector.broadcast %cst_16 : f32 to vector<1x1024xf32>
    %32 = arith.cmpf ogt, %30, %31 : vector<1x1024xf32>
    %33 = arith.extui %32 : vector<1x1024xi1> to vector<1x1024xi32>
    %34 = arith.sitofp %33 : vector<1x1024xi32> to vector<1x1024xf32>
    %c0_17 = arith.constant 0 : index
    %c0_18 = arith.constant 0 : index
    %35 = vector.load %arg5[%c0_17, %c0_18] : memref<1x1024xf32, #tpu.memory_space<vmem>>, vector<1x1024xf32>
    tpu.vector_store %arg5[%c0_17, %c0_18], %34 {strides = array<i32>} : memref<1x1024xf32, #tpu.memory_space<vmem>>, vector<1x1024xf32>,
    return
  }
  func.func @transform_0(%arg0: i32) -> (i32, i32) {
    %c0_i32 = arith.constant 0 : i32
    %c0_i32_0 = arith.constant 0 : i32
    %c0_i32_1 = arith.constant 0 : i32
    return %c0_i32, %c0_i32_0 : i32, i32
  }
  func.func @transform_1(%arg0: i32) -> (i32, i32) {
    %c0_i32 = arith.constant 0 : i32
    %c0_i32_0 = arith.constant 0 : i32
    %c0_i32_1 = arith.constant 0 : i32
    return %c0_i32, %c0_i32_0 : i32, i32
  }
  func.func @transform_2(%arg0: i32) -> (i32, i32) {
    %c0_i32 = arith.constant 0 : i32
    %c0_i32_0 = arith.constant 0 : i32
    %c0_i32_1 = arith.constant 0 : i32
    return %c0_i32, %c0_i32_0 : i32, i32
  }
  func.func @transform_3(%arg0: i32) -> (i32, i32) {
    %c0_i32 = arith.constant 0 : i32
    %c0_i32_0 = arith.constant 0 : i32
    %c0_i32_1 = arith.constant 0 : i32
    return %c0_i32, %c0_i32_0 : i32, i32
  }
  func.func @transform_4(%arg0: i32) -> (i32, i32) {
    %c0_i32 = arith.constant 0 : i32
    %c0_i32_0 = arith.constant 0 : i32
    %c0_i32_1 = arith.constant 0 : i32
    return %c0_i32, %c0_i32_0 : i32, i32
  }
}

</mosaic_0001>

<llo_original>
// kernel: dino_matcher_forward.1
$region0: #{dino_matcher_forward.1}
  #allocation0 [shape = 'u32[]', space=smem, size = 0x4, offset = 0x4, fixed_abs, tag = 'smem constant byte address 0x4 - core index']
  #allocation1 [shape = 'u32[144,128]{1,0:T(1,128)}', space=vmem, size = 0x12000, scoped, tag = 'internal scratch']
  %s0 = inlined_call_operand.vmem [shape: f32[48,128], index: 0, kind: input, shape index: {}]
  %s1 = inlined_call_operand.vmem [shape: f32[128,128], index: 1, kind: input, shape index: {}]
  %s2 = inlined_call_operand.vmem [shape: f32[2,48], index: 2, kind: input, shape index: {}]
  %s3 = inlined_call_operand.vmem [shape: f32[16,1024], index: 3, kind: input, shape index: {}]
  %s4 = inlined_call_operand.vmem [shape: f32[1,1024], index: 4, kind: output, shape index: {}]
  %s5 = sld [smem:[#allocation0]]
  $region26: #{dino_matcher_forward.1} parent=0
    _
  %s7 = ssub.s32 1, %s5
  %s8 = scalar_select 0, %s7, %s5
  // Predicated region
  $region2: #{dino_matcher_forward.1} parent=0 // pred_check
    _
  $region3: #{dino_matcher_forward.1} parent=0 // pred_check_branch
    %10 = sbr.rel (0) target = $region5
  $region4: #{dino_matcher_forward.1} parent=0 // pred_region
    _
  $region5: #{dino_matcher_forward.1} parent=0 // pred_fallthru
    _
  // Predicated region
  $region6: #{dino_matcher_forward.1} parent=0 // pred_check
    _
  $region7: #{dino_matcher_forward.1} parent=0 // pred_check_branch
    %12 = sbr.rel (0) target = $region9
  $region8: #{dino_matcher_forward.1} parent=0 // pred_region
    _
  $region9: #{dino_matcher_forward.1} parent=0 // pred_fallthru
    _
  // Predicated region
  $region10: #{dino_matcher_forward.1} parent=0 // pred_check
    _
  $region11: #{dino_matcher_forward.1} parent=0 // pred_check_branch
    %14 = sbr.rel (0) target = $region13
  $region12: #{dino_matcher_forward.1} parent=0 // pred_region
    _
  $region13: #{dino_matcher_forward.1} parent=0 // pred_fallthru
    _
  // Predicated region
  $region14: #{dino_matcher_forward.1} parent=0 // pred_check
    _
  $region15: #{dino_matcher_forward.1} parent=0 // pred_check_branch
    %16 = sbr.rel (0) target = $region17
  $region16: #{dino_matcher_forward.1} parent=0 // pred_region
    _
  $region17: #{dino_matcher_forward.1} parent=0 // pred_fallthru
    _
  %v17 = vld [vmem:[%s0] sm:$0xff]
  %v18 = vld [vmem:[%s0 + $0x8] sm:$0xff]
  %v19 = vld [vmem:[%s0 + $0x10] sm:$0xff]
  %v20 = vld [vmem:[%s0 + $0x18] sm:$0xff]
  %v21 = vld [vmem:[%s0 + $0x20] sm:$0xff]
  %v22 = vld [vmem:[%s0 + $0x28] sm:$0xff]
  %v23 = vld [vmem:[%s1] sm:$0xff]
  %v24 = vld [vmem:[%s1 + $0x8] sm:$0xff]
  %v25 = vld [vmem:[%s1 + $0x10] sm:$0xff]
  %v26 = vld [vmem:[%s1 + $0x18] sm:$0xff]
  %v27 = vld [vmem:[%s1 + $0x20] sm:$0xff]
  %v28 = vld [vmem:[%s1 + $0x28] sm:$0xff]
  %v29 = vld [vmem:[%s1 + $0x30] sm:$0xff]
  %v30 = vld [vmem:[%s1 + $0x38] sm:$0xff]
  %v31 = vld [vmem:[%s1 + $0x40] sm:$0xff]
  %v32 = vld [vmem:[%s1 + $0x48] sm:$0xff]
  %v33 = vld [vmem:[%s1 + $0x50] sm:$0xff]
  %v34 = vld [vmem:[%s1 + $0x58] sm:$0xff]
  %v35 = vld [vmem:[%s1 + $0x60] sm:$0xff]
  %v36 = vld [vmem:[%s1 + $0x68] sm:$0xff]
  %v37 = vld [vmem:[%s1 + $0x70] sm:$0xff]
  %v38 = vld [vmem:[%s1 + $0x78] sm:$0xff]
  %39 = vmatprep.subr.mxu0 0.0
  %40 = vmatpush1.msra.mxu0 %v23
  %41 = vmatprep.subr.mxu0 0.0
  %42 = vmatpush1.msra.mxu0 %v24
  %43 = vmatprep.subr.mxu0 0.0
  %44 = vmatpush1.msra.mxu0 %v25
  %45 = vmatprep.subr.mxu0 0.0
  %46 = vmatpush1.msra.mxu0 %v26
  %47 = vmatprep.subr.mxu0 0.0
  %48 = vmatpush1.msra.mxu0 %v27
  %49 = vmatprep.subr.mxu0 0.0
  %50 = vmatpush1.msra.mxu0 %v28
  %51 = vmatprep.subr.mxu0 0.0
  %52 = vmatpush1.msra.mxu0 %v29
  %53 = vmatprep.subr.mxu0 0.0
  %54 = vmatpush1.msra.mxu0 %v30
  %55 = vmatprep.subr.mxu0 0.0
  %56 = vmatpush1.msra.mxu0 %v31
  %57 = vmatprep.subr.mxu0 0.0
  %58 = vmatpush1.msra.mxu0 %v32
  %59 = vmatprep.subr.mxu0 0.0
  %60 = vmatpush1.msra.mxu0 %v33
  %61 = vmatprep.subr.mxu0 0.0
  %62 = vmatpush1.msra.mxu0 %v34
  %63 = vmatprep.subr.mxu0 0.0
  %64 = vmatpush1.msra.mxu0 %v35
  %65 = vmatprep.subr.mxu0 0.0
  %66 = vmatpush1.msra.mxu0 %v36
  %67 = vmatprep.subr.mxu0 0.0
  %68 = vmatpush1.msra.mxu0 %v37
  %69 = vmatprep.subr.mxu0 0.0
  %70 = vmatpush1.msra.mxu0 %v38
  %71 = vmatprep.subr.mxu0 0.0
  %72 = vmatpush1.msra.mxu0 0.0
  %73 = vmatprep.subr.mxu0 0.0
  %74 = vmatpush1.msra.mxu0 0.0
  %75 = vmatprep.subr.mxu0 0.0
  %76 = vmatpush1.msra.mxu0 0.0
  %77 = vmatprep.subr.mxu0 0.0
  %78 = vmatpush1.msra.mxu0 0.0
  %79 = vmatprep.subr.mxu0 0.0
  %80 = vmatpush1.msra.mxu0 0.0
  %81 = vmatprep.subr.mxu0 0.0
  %82 = vmatpush1.msra.mxu0 0.0
  %83 = vmatprep.subr.mxu0 0.0
  %84 = vmatpush1.msra.mxu0 0.0
  %85 = vmatprep.subr.mxu0 0.0
  %86 = vmatpush1.msra.mxu0 0.0
  %87 = vmatprep.subr.mxu0 0.0
  %88 = vmatpush1.msra.mxu0 0.0
  %89 = vmatprep.subr.mxu0 0.0
  %90 = vmatpush1.msra.mxu0 0.0
  %91 = vmatprep.subr.mxu0 0.0
  %92 = vmatpush1.msra.mxu0 0.0
  %93 = vmatprep.subr.mxu0 0.0
  %94 = vmatpush1.msra.mxu0 0.0
  %95 = vmatprep.subr.mxu0 0.0
  %96 = vmatpush1.msra.mxu0 0.0
  %97 = vmatprep.subr.mxu0 0.0
  %98 = vmatpush1.msra.mxu0 0.0
  %99 = vmatprep.subr.mxu0 0.0
  %100 = vmatpush1.msra.mxu0 0.0
  %101 = vmatprep.subr.mxu0 0.0
  %102 = vmatpush1.msra.mxu0 0.0
  %103 = vmatprep.mubr.f32.mxu0 0.0
  %104 = vmatmul.mubr.f32.gmra.mrb[0].mxu0 %v17
  %v105 = vpop.f32.mrb[0].mxu0
  %v106 = vadd.f32 0.0, %v105
  %v107 = vpop.f32.mrb[0].mxu0
  %108 = vmatprep.mubr.f32.mxu0 0.0
  %109 = vmatmul.mubr.f32.gmra.mrb[0].mxu0 %v18
  %v110 = vpop.f32.mrb[0].mxu0
  %v111 = vadd.f32 0.0, %v110
  %v112 = vpop.f32.mrb[0].mxu0
  %113 = vmatprep.mubr.f32.mxu0 0.0
  %114 = vmatmul.mubr.f32.gmra.mrb[0].mxu0 %v19
  %v115 = vpop.f32.mrb[0].mxu0
  %v116 = vadd.f32 0.0, %v115
  %v117 = vpop.f32.mrb[0].mxu0
  %118 = vmatprep.mubr.f32.mxu0 0.0
  %119 = vmatmul.mubr.f32.gmra.mrb[0].mxu0 %v20
  %v120 = vpop.f32.mrb[0].mxu0
  %v121 = vadd.f32 0.0, %v120
  %v122 = vpop.f32.mrb[0].mxu0
  %123 = vmatprep.mubr.f32.mxu0 0.0
  %124 = vmatmul.mubr.f32.gmra.mrb[0].mxu0 %v21
  %v125 = vpop.f32.mrb[0].mxu0
  %v126 = vadd.f32 0.0, %v125
  %v127 = vpop.f32.mrb[0].mxu0
  %128 = vmatprep.mubr.f32.mxu0 0.0
  %129 = vmatmul.mubr.f32.gmra.mrb[0].mxu0 %v22
  %v130 = vpop.f32.mrb[0].mxu0
  %v131 = vadd.f32 0.0, %v130
  %v132 = vpop.f32.mrb[0].mxu0
  %133 = vdwg.mxu0
  %v134 = vmul.f32 %v106, %v106
  %v135 = vmul.f32 %v111, %v111
  %136 = vadd.xlane.f32.xlu0 %v134
  %v137 = vpop.xlane.xlu0 %136
  %138 = vadd.xlane.f32.xlu0 %v135
  %v139 = vpop.xlane.xlu0 %138
  %v140 = vrsqrt.pop %v137
  %v141 = vrsqrt.pop %v139
  %v142 = vmul.f32 %v106, %v140
  %v143 = vmul.f32 %v111, %v141
  %v144 = vadd.f32 %v142, 1e-06
  %v145 = vadd.f32 %v143, 1e-06
  %v146 = vld [vmem:[%s2] sm:$0x3]
  %vm147 = vcmask 392192
  %v149 = vsel %vm147, %v146, 0
  %151 = vmatprep.subr.mxu0 0.0
  %152 = vmatpush1.msra.mxu0 %v106
  %153 = vmatprep.subr.mxu0 0.0
  %154 = vmatpush1.msra.mxu0 %v111
  %155 = vmatprep.subr.mxu0 0.0
  %156 = vmatpush1.msra.mxu0 %v116
  %157 = vmatprep.subr.mxu0 0.0
  %158 = vmatpush1.msra.mxu0 %v121
  %159 = vmatprep.subr.mxu0 0.0
  %160 = vmatpush1.msra.mxu0 %v126
  %161 = vmatprep.subr.mxu0 0.0
  %162 = vmatpush1.msra.mxu0 %v131
  %163 = vmatprep.subr.mxu0 0.0
  %164 = vmatpush1.msra.mxu0 0.0
  %165 = vmatprep.subr.mxu0 0.0
  %166 = vmatpush1.msra.mxu0 0.0
  %167 = vmatprep.subr.mxu0 0.0
  %168 = vmatpush1.msra.mxu0 0.0
  %169 = vmatprep.subr.mxu0 0.0
  %170 = vmatpush1.msra.mxu0 0.0
  %171 = vmatprep.subr.mxu0 0.0
  %172 = vmatpush1.msra.mxu0 0.0
  %173 = vmatprep.subr.mxu0 0.0
  %174 = vmatpush1.msra.mxu0 0.0
  %175 = vmatprep.subr.mxu0 0.0
  %176 = vmatpush1.msra.mxu0 0.0
  %177 = vmatprep.subr.mxu0 0.0
  %178 = vmatpush1.msra.mxu0 0.0
  %179 = vmatprep.subr.mxu0 0.0
  %180 = vmatpush1.msra.mxu0 0.0
  %181 = vmatprep.subr.mxu0 0.0
  %182 = vmatpush1.msra.mxu0 0.0
  %183 = vmatprep.subr.mxu0 0.0
  %184 = vmatpush1.msra.mxu0 0.0
  %185 = vmatprep.subr.mxu0 0.0
  %186 = vmatpush1.msra.mxu0 0.0
  %187 = vmatprep.subr.mxu0 0.0
  %188 = vmatpush1.msra.mxu0 0.0
  %189 = vmatprep.subr.mxu0 0.0
  %190 = vmatpush1.msra.mxu0 0.0
  %191 = vmatprep.subr.mxu0 0.0
  %192 = vmatpush1.msra.mxu0 0.0
  %193 = vmatprep.subr.mxu0 0.0
  %194 = vmatpush1.msra.mxu0 0.0
  %195 = vmatprep.subr.mxu0 0.0
  %196 = vmatpush1.msra.mxu0 0.0
  %197 = vmatprep.subr.mxu0 0.0
  %198 = vmatpush1.msra.mxu0 0.0
  %199 = vmatprep.subr.mxu0 0.0
  %200 = vmatpush1.msra.mxu0 0.0
  %201 = vmatprep.subr.mxu0 0.0
  %202 = vmatpush1.msra.mxu0 0.0
  %203 = vmatprep.subr.mxu0 0.0
  %204 = vmatpush1.msra.mxu0 0.0
  %205 = vmatprep.subr.mxu0 0.0
  %206 = vmatpush1.msra.mxu0 0.0
  %207 = vmatprep.subr.mxu0 0.0
  %208 = vmatpush1.msra.mxu0 0.0
  %209 = vmatprep.subr.mxu0 0.0
  %210 = vmatpush1.msra.mxu0 0.0
  %211 = vmatprep.subr.mxu0 0.0
  %212 = vmatpush1.msra.mxu0 0.0
  %213 = vmatprep.subr.mxu0 0.0
  %214 = vmatpush1.msra.mxu0 0.0
  %215 = vmatprep.mubr.f32.mxu0 0.0
  %216 = vmatmul.mubr.f32.gmra.mrb[0].mxu0 %v149
  %v217 = vpop.f32.mrb[0].mxu0
  %v218 = vadd.f32 0.0, %v217
  %v219 = vpop.f32.mrb[0].mxu0
  %220 = vdwg.mxu0
  %v221 = vmul.f32 %v218, %v218
  %vm222 = vcmask 1041408
  %v223 = vsel %vm222, %v221, 0.0
  %224 = vadd.xlane.f32.xlu0 %v223
  %v225 = vpop.xlane.xlu0 %224
  %v226 = vrsqrt.pop %v225
  %v227 = vmul.f32 %v218, %v226
  %v228 = vadd.f32 %v227, 1e-06
  %229 = vmatprep.subr.mxu0 0.0
  %230 = vmatpush1.xpose.msra.mxu0 %v144
  %231 = vmatprep.subr.mxu0 0.0
  %232 = vmatpush1.xpose.msra.mxu0 %v145
  %233 = vmatprep.subr.mxu0 0.0
  %234 = vmatpush1.xpose.msra.mxu0 0.0
  %235 = vmatprep.subr.mxu0 0.0
  %236 = vmatpush1.xpose.msra.mxu0 0.0
  %237 = vmatprep.subr.mxu0 0.0
  %238 = vmatpush1.xpose.msra.mxu0 0.0
  %239 = vmatprep.subr.mxu0 0.0
  %240 = vmatpush1.xpose.msra.mxu0 0.0
  %241 = vmatprep.subr.mxu0 0.0
  %242 = vmatpush1.xpose.msra.mxu0 0.0
  %243 = vmatprep.subr.mxu0 0.0
  %244 = vmatpush1.xpose.msra.mxu0 0.0
  %245 = vmatprep.subr.mxu0 0.0
  %246 = vmatpush1.xpose.msra.mxu0 0.0
  %247 = vmatprep.subr.mxu0 0.0
  %248 = vmatpush1.xpose.msra.mxu0 0.0
  %249 = vmatprep.subr.mxu0 0.0
  %250 = vmatpush1.xpose.msra.mxu0 0.0
  %251 = vmatprep.subr.mxu0 0.0
  %252 = vmatpush1.xpose.msra.mxu0 0.0
  %253 = vmatprep.subr.mxu0 0.0
  %254 = vmatpush1.xpose.msra.mxu0 0.0
  %255 = vmatprep.subr.mxu0 0.0
  %256 = vmatpush1.xpose.msra.mxu0 0.0
  %257 = vmatprep.subr.mxu0 0.0
  %258 = vmatpush1.xpose.msra.mxu0 0.0
  %259 = vmatprep.subr.mxu0 0.0
  %260 = vmatpush1.xpose.msra.mxu0 0.0
  %261 = vmatprep.subr.mxu0 0.0
  %262 = vmatpush1.xpose.msra.mxu0 0.0
  %263 = vmatprep.subr.mxu0 0.0
  %264 = vmatpush1.xpose.msra.mxu0 0.0
  %265 = vmatprep.subr.mxu0 0.0
  %266 = vmatpush1.xpose.msra.mxu0 0.0
  %267 = vmatprep.subr.mxu0 0.0
  %268 = vmatpush1.xpose.msra.mxu0 0.0
  %269 = vmatprep.subr.mxu0 0.0
  %270 = vmatpush1.xpose.msra.mxu0 0.0
  %271 = vmatprep.subr.mxu0 0.0
  %272 = vmatpush1.xpose.msra.mxu0 0.0
  %273 = vmatprep.subr.mxu0 0.0
  %274 = vmatpush1.xpose.msra.mxu0 0.0
  %275 = vmatprep.subr.mxu0 0.0
  %276 = vmatpush1.xpose.msra.mxu0 0.0
  %277 = vmatprep.subr.mxu0 0.0
  %278 = vmatpush1.xpose.msra.mxu0 0.0
  %279 = vmatprep.subr.mxu0 0.0
  %280 = vmatpush1.xpose.msra.mxu0 0.0
  %281 = vmatprep.subr.mxu0 0.0
  %282 = vmatpush1.xpose.msra.mxu0 0.0
  %283 = vmatprep.subr.mxu0 0.0
  %284 = vmatpush1.xpose.msra.mxu0 0.0
  %285 = vmatprep.subr.mxu0 0.0
  %286 = vmatpush1.xpose.msra.mxu0 0.0
  %287 = vmatprep.subr.mxu0 0.0
  %288 = vmatpush1.xpose.msra.mxu0 0.0
  %289 = vmatprep.subr.mxu0 0.0
  %290 = vmatpush1.xpose.msra.mxu0 0.0
  %291 = vmatprep.subr.mxu0 0.0
  %292 = vmatpush1.xpose.msra.mxu0 0.0
  %293 = vmatprep.mubr.f32.mxu0 0.0
  %294 = vmatmul.mubr.f32.gmra.mrb[0].mxu0 %v228
  %v295 = vpop.f32.mrb[0].mxu0
  %v296 = vadd.f32 0.0, %v295
  %v297 = vpop.f32.mrb[0].mxu0
  %298 = vdwg.mxu0
  %vm299 = vcmask 123904
  %v300 = vsel %vm299, %v296, -inf
  %v301 = vrot.slane %v300, 4
  %v302 = vmax.f32 %v300, %v301
  %v303 = vrot.slane %v302, 2
  %v304 = vmax.f32 %v302, %v303
  %v305 = vrot.slane %v304, 1
  %v306 = vmax.f32 %v304, %v305
  %vm307 = vcmp.gt.f32.partialorder %v306, 0.5
  %v308 = vsel %vm307, 1, 0
  %v309 = vcvt.s32.f32 %v308
  %v310 = vld [vmem:[%s3] sm:$0xff]
  %v311 = vld [vmem:[%s3 + $0x8] sm:$0xff]
  %v312 = vld [vmem:[%s3 + $0x10] sm:$0xff]
  %v313 = vld [vmem:[%s3 + $0x18] sm:$0xff]
  %v314 = vld [vmem:[%s3 + $0x20] sm:$0xff]
  %v315 = vld [vmem:[%s3 + $0x28] sm:$0xff]
  %v316 = vld [vmem:[%s3 + $0x30] sm:$0xff]
  %v317 = vld [vmem:[%s3 + $0x38] sm:$0xff]
  %v318 = vld [vmem:[%s3 + $0x40] sm:$0xff]
  %v319 = vld [vmem:[%s3 + $0x48] sm:$0xff]
  %v320 = vld [vmem:[%s3 + $0x50] sm:$0xff]
  %v321 = vld [vmem:[%s3 + $0x58] sm:$0xff]
  %v322 = vld [vmem:[%s3 + $0x60] sm:$0xff]
  %v323 = vld [vmem:[%s3 + $0x68] sm:$0xff]
  %v324 = vld [vmem:[%s3 + $0x70] sm:$0xff]
  %v325 = vld [vmem:[%s3 + $0x78] sm:$0xff]
  %vm326 = vcmask 130048
  %v328 = vsel %vm326, %v309, 0
  %330 = vmatprep.subr.mxu0 %v311
  %331 = vmatpush1.msra.mxu0 %v310
  %332 = vmatprep.subr.mxu0 %v319
  %333 = vmatpush1.msra.mxu0 %v318
  %334 = vmatprep.subr.mxu0 0.0
  %335 = vmatpush1.msra.mxu0 0.0
  %336 = vmatprep.subr.mxu0 0.0
  %337 = vmatpush1.msra.mxu0 0.0
  %338 = vmatprep.subr.mxu0 0.0
  %339 = vmatpush1.msra.mxu0 0.0
  %340 = vmatprep.subr.mxu0 0.0
  %341 = vmatpush1.msra.mxu0 0.0
  %342 = vmatprep.subr.mxu0 0.0
  %343 = vmatpush1.msra.mxu0 0.0
  %344 = vmatprep.subr.mxu0 0.0
  %345 = vmatpush1.msra.mxu0 0.0
  %346 = vmatprep.subr.mxu0 0.0
  %347 = vmatpush1.msra.mxu0 0.0
  %348 = vmatprep.subr.mxu0 0.0
  %349 = vmatpush1.msra.mxu0 0.0
  %350 = vmatprep.subr.mxu0 0.0
  %351 = vmatpush1.msra.mxu0 0.0
  %352 = vmatprep.subr.mxu0 0.0
  %353 = vmatpush1.msra.mxu0 0.0
  %354 = vmatprep.subr.mxu0 0.0
  %355 = vmatpush1.msra.mxu0 0.0
  %356 = vmatprep.subr.mxu0 0.0
  %357 = vmatpush1.msra.mxu0 0.0
  %358 = vmatprep.subr.mxu0 0.0
  %359 = vmatpush1.msra.mxu0 0.0
  %360 = vmatprep.subr.mxu0 0.0
  %361 = vmatpush1.msra.mxu0 0.0
  %362 = vmatprep.subr.mxu0 0.0
  %363 = vmatpush1.msra.mxu0 0.0
  %364 = vmatprep.subr.mxu0 0.0
  %365 = vmatpush1.msra.mxu0 0.0
  %366 = vmatprep.subr.mxu0 0.0
  %367 = vmatpush1.msra.mxu0 0.0
  %368 = vmatprep.subr.mxu0 0.0
  %369 = vmatpush1.msra.mxu0 0.0
  %370 = vmatprep.subr.mxu0 0.0
  %371 = vmatpush1.msra.mxu0 0.0
  %372 = vmatprep.subr.mxu0 0.0
  %373 = vmatpush1.msra.mxu0 0.0
  %374 = vmatprep.subr.mxu0 0.0
  %375 = vmatpush1.msra.mxu0 0.0
  %376 = vmatprep.subr.mxu0 0.0
  %377 = vmatpush1.msra.mxu0 0.0
  %378 = vmatprep.subr.mxu0 0.0
  %379 = vmatpush1.msra.mxu0 0.0
  %380 = vmatprep.subr.mxu0 0.0
  %381 = vmatpush1.msra.mxu0 0.0
  %382 = vmatprep.subr.mxu0 0.0
  %383 = vmatpush1.msra.mxu0 0.0
  %384 = vmatprep.subr.mxu0 0.0
  %385 = vmatpush1.msra.mxu0 0.0
  %386 = vmatprep.subr.mxu0 0.0
  %387 = vmatpush1.msra.mxu0 0.0
  %388 = vmatprep.subr.mxu0 0.0
  %389 = vmatpush1.msra.mxu0 0.0
  %390 = vmatprep.subr.mxu0 0.0
  %391 = vmatpush1.msra.mxu0 0.0
  %392 = vmatprep.subr.mxu0 0.0
  %393 = vmatpush1.msra.mxu0 0.0
  %394 = vmatprep.mubr.f32.mxu0 0.0
  %395 = vmatmul.mubr.f32.gmra.mrb[0].mxu0 %v328
  %v396 = vpop.f32.mrb[0].mxu0
  %v397 = vadd.f32 0.0, %v396
  %v398 = vpop.f32.mrb[0].mxu0
  %v399 = vadd.f32 0.0, %v398
  %400 = vdwg.mxu0
  %401 = vmatprep.subr.mxu0 %v313
  %402 = vmatpush1.msra.mxu0 %v312
  %403 = vmatprep.subr.mxu0 %v321
  %404 = vmatpush1.msra.mxu0 %v320
  %405 = vmatprep.subr.mxu0 0.0
  %406 = vmatpush1.msra.mxu0 0.0
  %407 = vmatprep.subr.mxu0 0.0
  %408 = vmatpush1.msra.mxu0 0.0
  %409 = vmatprep.subr.mxu0 0.0
  %410 = vmatpush1.msra.mxu0 0.0
  %411 = vmatprep.subr.mxu0 0.0
  %412 = vmatpush1.msra.mxu0 0.0
  %413 = vmatprep.subr.mxu0 0.0
  %414 = vmatpush1.msra.mxu0 0.0
  %415 = vmatprep.subr.mxu0 0.0
  %416 = vmatpush1.msra.mxu0 0.0
  %417 = vmatprep.subr.mxu0 0.0
  %418 = vmatpush1.msra.mxu0 0.0
  %419 = vmatprep.subr.mxu0 0.0
  %420 = vmatpush1.msra.mxu0 0.0
  %421 = vmatprep.subr.mxu0 0.0
  %422 = vmatpush1.msra.mxu0 0.0
  %423 = vmatprep.subr.mxu0 0.0
  %424 = vmatpush1.msra.mxu0 0.0
  %425 = vmatprep.subr.mxu0 0.0
  %426 = vmatpush1.msra.mxu0 0.0
  %427 = vmatprep.subr.mxu0 0.0
  %428 = vmatpush1.msra.mxu0 0.0
  %429 = vmatprep.subr.mxu0 0.0
  %430 = vmatpush1.msra.mxu0 0.0
  %431 = vmatprep.subr.mxu0 0.0
  %432 = vmatpush1.msra.mxu0 0.0
  %433 = vmatprep.subr.mxu0 0.0
  %434 = vmatpush1.msra.mxu0 0.0
  %435 = vmatprep.subr.mxu0 0.0
  %436 = vmatpush1.msra.mxu0 0.0
  %437 = vmatprep.subr.mxu0 0.0
  %438 = vmatpush1.msra.mxu0 0.0
  %439 = vmatprep.subr.mxu0 0.0
  %440 = vmatpush1.msra.mxu0 0.0
  %441 = vmatprep.subr.mxu0 0.0
  %442 = vmatpush1.msra.mxu0 0.0
  %443 = vmatprep.subr.mxu0 0.0
  %444 = vmatpush1.msra.mxu0 0.0
  %445 = vmatprep.subr.mxu0 0.0
  %446 = vmatpush1.msra.mxu0 0.0
  %447 = vmatprep.subr.mxu0 0.0
  %448 = vmatpush1.msra.mxu0 0.0
  %449 = vmatprep.subr.mxu0 0.0
  %450 = vmatpush1.msra.mxu0 0.0
  %451 = vmatprep.subr.mxu0 0.0
  %452 = vmatpush1.msra.mxu0 0.0
  %453 = vmatprep.subr.mxu0 0.0
  %454 = vmatpush1.msra.mxu0 0.0
  %455 = vmatprep.subr.mxu0 0.0
  %456 = vmatpush1.msra.mxu0 0.0
  %457 = vmatprep.subr.mxu0 0.0
  %458 = vmatpush1.msra.mxu0 0.0
  %459 = vmatprep.subr.mxu0 0.0
  %460 = vmatpush1.msra.mxu0 0.0
  %461 = vmatprep.subr.mxu0 0.0
  %462 = vmatpush1.msra.mxu0 0.0
  %463 = vmatprep.subr.mxu0 0.0
  %464 = vmatpush1.msra.mxu0 0.0
  %465 = vmatprep.mubr.f32.mxu0 0.0
  %466 = vmatmul.mubr.f32.gmra.mrb[0].mxu0 %v328
  %v467 = vpop.f32.mrb[0].mxu0
  %v468 = vadd.f32 0.0, %v467
  %v469 = vpop.f32.mrb[0].mxu0
  %v470 = vadd.f32 0.0, %v469
  %471 = vdwg.mxu0
  %472 = vmatprep.subr.mxu0 %v315
  %473 = vmatpush1.msra.mxu0 %v314
  %474 = vmatprep.subr.mxu0 %v323
  %475 = vmatpush1.msra.mxu0 %v322
  %476 = vmatprep.subr.mxu0 0.0
  %477 = vmatpush1.msra.mxu0 0.0
  %478 = vmatprep.subr.mxu0 0.0
  %479 = vmatpush1.msra.mxu0 0.0
  %480 = vmatprep.subr.mxu0 0.0
  %481 = vmatpush1.msra.mxu0 0.0
  %482 = vmatprep.subr.mxu0 0.0
  %483 = vmatpush1.msra.mxu0 0.0
  %484 = vmatprep.subr.mxu0 0.0
  %485 = vmatpush1.msra.mxu0 0.0
  %486 = vmatprep.subr.mxu0 0.0
  %487 = vmatpush1.msra.mxu0 0.0
  %488 = vmatprep.subr.mxu0 0.0
  %489 = vmatpush1.msra.mxu0 0.0
  %490 = vmatprep.subr.mxu0 0.0
  %491 = vmatpush1.msra.mxu0 0.0
  %492 = vmatprep.subr.mxu0 0.0
  %493 = vmatpush1.msra.mxu0 0.0
  %494 = vmatprep.subr.mxu0 0.0
  %495 = vmatpush1.msra.mxu0 0.0
  %496 = vmatprep.subr.mxu0 0.0
  %497 = vmatpush1.msra.mxu0 0.0
  %498 = vmatprep.subr.mxu0 0.0
  %499 = vmatpush1.msra.mxu0 0.0
  %500 = vmatprep.subr.mxu0 0.0
  %501 = vmatpush1.msra.mxu0 0.0
  %502 = vmatprep.subr.mxu0 0.0
  %503 = vmatpush1.msra.mxu0 0.0
  %504 = vmatprep.subr.mxu0 0.0
  %505 = vmatpush1.msra.mxu0 0.0
  %506 = vmatprep.subr.mxu0 0.0
  %507 = vmatpush1.msra.mxu0 0.0
  %508 = vmatprep.subr.mxu0 0.0
  %509 = vmatpush1.msra.mxu0 0.0
  %510 = vmatprep.subr.mxu0 0.0
  %511 = vmatpush1.msra.mxu0 0.0
  %512 = vmatprep.subr.mxu0 0.0
  %513 = vmatpush1.msra.mxu0 0.0
  %514 = vmatprep.subr.mxu0 0.0
  %515 = vmatpush1.msra.mxu0 0.0
  %516 = vmatprep.subr.mxu0 0.0
  %517 = vmatpush1.msra.mxu0 0.0
  %518 = vmatprep.subr.mxu0 0.0
  %519 = vmatpush1.msra.mxu0 0.0
  %520 = vmatprep.subr.mxu0 0.0
  %521 = vmatpush1.msra.mxu0 0.0
  %522 = vmatprep.subr.mxu0 0.0
  %523 = vmatpush1.msra.mxu0 0.0
  %524 = vmatprep.subr.mxu0 0.0
  %525 = vmatpush1.msra.mxu0 0.0
  %526 = vmatprep.subr.mxu0 0.0
  %527 = vmatpush1.msra.mxu0 0.0
  %528 = vmatprep.subr.mxu0 0.0
  %529 = vmatpush1.msra.mxu0 0.0
  %530 = vmatprep.subr.mxu0 0.0
  %531 = vmatpush1.msra.mxu0 0.0
  %532 = vmatprep.subr.mxu0 0.0
  %533 = vmatpush1.msra.mxu0 0.0
  %534 = vmatprep.subr.mxu0 0.0
  %535 = vmatpush1.msra.mxu0 0.0
  %536 = vmatprep.mubr.f32.mxu0 0.0
  %537 = vmatmul.mubr.f32.gmra.mrb[0].mxu0 %v328
  %v538 = vpop.f32.mrb[0].mxu0
  %v539 = vadd.f32 0.0, %v538
  %v540 = vpop.f32.mrb[0].mxu0
  %v541 = vadd.f32 0.0, %v540
  %542 = vdwg.mxu0
  %543 = vmatprep.subr.mxu0 %v317
  %544 = vmatpush1.msra.mxu0 %v316
  %545 = vmatprep.subr.mxu0 %v325
  %546 = vmatpush1.msra.mxu0 %v324
  %547 = vmatprep.subr.mxu0 0.0
  %548 = vmatpush1.msra.mxu0 0.0
  %549 = vmatprep.subr.mxu0 0.0
  %550 = vmatpush1.msra.mxu0 0.0
  %551 = vmatprep.subr.mxu0 0.0
  %552 = vmatpush1.msra.mxu0 0.0
  %553 = vmatprep.subr.mxu0 0.0
  %554 = vmatpush1.msra.mxu0 0.0
  %555 = vmatprep.subr.mxu0 0.0
  %556 = vmatpush1.msra.mxu0 0.0
  %557 = vmatprep.subr.mxu0 0.0
  %558 = vmatpush1.msra.mxu0 0.0
  %559 = vmatprep.subr.mxu0 0.0
  %560 = vmatpush1.msra.mxu0 0.0
  %561 = vmatprep.subr.mxu0 0.0
  %562 = vmatpush1.msra.mxu0 0.0
  %563 = vmatprep.subr.mxu0 0.0
  %564 = vmatpush1.msra.mxu0 0.0
  %565 = vmatprep.subr.mxu0 0.0
  %566 = vmatpush1.msra.mxu0 0.0
  %567 = vmatprep.subr.mxu0 0.0
  %568 = vmatpush1.msra.mxu0 0.0
  %569 = vmatprep.subr.mxu0 0.0
  %570 = vmatpush1.msra.mxu0 0.0
  %571 = vmatprep.subr.mxu0 0.0
  %572 = vmatpush1.msra.mxu0 0.0
  %573 = vmatprep.subr.mxu0 0.0
  %574 = vmatpush1.msra.mxu0 0.0
  %575 = vmatprep.subr.mxu0 0.0
  %576 = vmatpush1.msra.mxu0 0.0
  %577 = vmatprep.subr.mxu0 0.0
  %578 = vmatpush1.msra.mxu0 0.0
  %579 = vmatprep.subr.mxu0 0.0
  %580 = vmatpush1.msra.mxu0 0.0
  %581 = vmatprep.subr.mxu0 0.0
  %582 = vmatpush1.msra.mxu0 0.0
  %583 = vmatprep.subr.mxu0 0.0
  %584 = vmatpush1.msra.mxu0 0.0
  %585 = vmatprep.subr.mxu0 0.0
  %586 = vmatpush1.msra.mxu0 0.0
  %587 = vmatprep.subr.mxu0 0.0
  %588 = vmatpush1.msra.mxu0 0.0
  %589 = vmatprep.subr.mxu0 0.0
  %590 = vmatpush1.msra.mxu0 0.0
  %591 = vmatprep.subr.mxu0 0.0
  %592 = vmatpush1.msra.mxu0 0.0
  %593 = vmatprep.subr.mxu0 0.0
  %594 = vmatpush1.msra.mxu0 0.0
  %595 = vmatprep.subr.mxu0 0.0
  %596 = vmatpush1.msra.mxu0 0.0
  %597 = vmatprep.subr.mxu0 0.0
  %598 = vmatpush1.msra.mxu0 0.0
  %599 = vmatprep.subr.mxu0 0.0
  %600 = vmatpush1.msra.mxu0 0.0
  %601 = vmatprep.subr.mxu0 0.0
  %602 = vmatpush1.msra.mxu0 0.0
  %603 = vmatprep.subr.mxu0 0.0
  %604 = vmatpush1.msra.mxu0 0.0
  %605 = vmatprep.subr.mxu0 0.0
  %606 = vmatpush1.msra.mxu0 0.0
  %607 = vmatprep.mubr.f32.mxu0 0.0
  %608 = vmatmul.mubr.f32.gmra.mrb[0].mxu0 %v328
  %v609 = vpop.f32.mrb[0].mxu0
  %v610 = vadd.f32 0.0, %v609
  %v611 = vpop.f32.mrb[0].mxu0
  %v612 = vadd.f32 0.0, %v611
  %613 = vdwg.mxu0
  %vm614 = vcmp.gt.f32.partialorder %v397, 0.0
  %vm615 = vcmp.gt.f32.partialorder %v399, 0.0
  %vm616 = vcmp.gt.f32.partialorder %v468, 0.0
  %vm617 = vcmp.gt.f32.partialorder %v470, 0.0
  %vm618 = vcmp.gt.f32.partialorder %v539, 0.0
  %vm619 = vcmp.gt.f32.partialorder %v541, 0.0
  %vm620 = vcmp.gt.f32.partialorder %v610, 0.0
  %vm621 = vcmp.gt.f32.partialorder %v612, 0.0
  %v622 = vsel %vm614, 1, 0
  %v623 = vsel %vm615, 1, 0
  %v624 = vsel %vm616, 1, 0
  %v625 = vsel %vm617, 1, 0
  %v626 = vsel %vm618, 1, 0
  %v627 = vsel %vm619, 1, 0
  %v628 = vsel %vm620, 1, 0
  %v629 = vsel %vm621, 1, 0
  %v630 = vcvt.s32.f32 %v622
  %v631 = vcvt.s32.f32 %v623
  %v632 = vcvt.s32.f32 %v624
  %v633 = vcvt.s32.f32 %v625
  %v634 = vcvt.s32.f32 %v626
  %v635 = vcvt.s32.f32 %v627
  %v636 = vcvt.s32.f32 %v628
  %v637 = vcvt.s32.f32 %v629
  %v646 = vcombine.low %v630, %v631
  %v647 = vcombine.low %v632, %v633
  %v648 = vcombine.low %v634, %v635
  %v649 = vcombine.low %v636, %v637
  %v651 = vunpack.c.l.s4 1966171168
  %v652 = vunpack.c.0.s8 %v651
  %v653 = vlaneseq
  %v654 = vshrl.u32 %v653, 7
  %v655 = vsub.s32 %v652, %v654
  %v656 = vrot.slane %v646, %v655
  %v658 = vunpack.c.l.s4 1966171168
  %v659 = vunpack.c.0.s8 %v658
  %v660 = vlaneseq
  %v661 = vshrl.u32 %v660, 7
  %v662 = vsub.s32 %v659, %v661
  %v663 = vrot.slane %v647, %v662
  %v665 = vunpack.c.l.s4 1966171168
  %v666 = vunpack.c.0.s8 %v665
  %v667 = vlaneseq
  %v668 = vshrl.u32 %v667, 7
  %v669 = vsub.s32 %v666, %v668
  %v670 = vrot.slane %v648, %v669
  %v672 = vunpack.c.l.s4 1966171168
  %v673 = vunpack.c.0.s8 %v672
  %v674 = vlaneseq
  %v675 = vshrl.u32 %v674, 7
  %v676 = vsub.s32 %v673, %v675
  %v677 = vrot.slane %v649, %v676
  %v678 = vcombine.low %v656, %v663
  %v679 = vcombine.low %v670, %v677
  %v681 = vunpack.c.l.s4 1966171168
  %v682 = vunpack.c.0.s8 %v681
  %v683 = vlaneseq
  %v684 = vshrl.u32 %v683, 7
  %v685 = vsub.s32 %v682, %v684
  %v686 = vrot.slane %v678, %v685
  %v688 = vunpack.c.l.s4 1966171168
  %v689 = vunpack.c.0.s8 %v688
  %v690 = vlaneseq
  %v691 = vshrl.u32 %v690, 7
  %v692 = vsub.s32 %v689, %v691
  %v693 = vrot.slane %v679, %v692
  %v694 = vcombine.low %v686, %v693
  %696 = vst [vmem:[%s4] sm:$0xff] %v694
  // Predicated region
  $region18: #{dino_matcher_forward.1} parent=0 // pred_check
    _
  $region19: #{dino_matcher_forward.1} parent=0 // pred_check_branch
    %698 = sbr.rel (0) target = $region21
  $region20: #{dino_matcher_forward.1} parent=0 // pred_region
    _
  $region21: #{dino_matcher_forward.1} parent=0 // pred_fallthru
    _
  // Predicated region
  $region22: #{dino_matcher_forward.1} parent=0 // pred_check
    _
  $region23: #{dino_matcher_forward.1} parent=0 // pred_check_branch
    %700 = sbr.rel (0) target = $region25
  $region24: #{dino_matcher_forward.1} parent=0 // pred_region
    _
  $region25: #{dino_matcher_forward.1} parent=0 // pred_fallthru
    _

</llo_original>
